<compile_context>
chip_gen: v6e
topology: v6e:2x2x1
jax: 0.10.0
libtpu: 0.0.40
codegen_flags: <defaults>
</compile_context>

<pallas_src>
import functools

import jax
import jax.numpy as jnp
from jax.experimental import pallas as pl
from jax.experimental.pallas import tpu as pltpu


def _round_up(x, m):
    return ((x + m - 1) // m) * m


def _actor_kernel(x_ref, w1_ref, w2_ref, w3_ref, b_ref, probs_ref):
    fc1 = w1_ref.shape[1]
    fc2 = w2_ref.shape[1]
    n_pad = w3_ref.shape[1]

    # Row-wise bias buffer: row 0 = b1, row 1 = b2, row 2 = b3 (padded action
    # lanes hold -1e30, kept f32).  All slices are lane-0 prefixes -> no
    # cross-lane relayout regardless of fc1/fc2 alignment.
    b1 = b_ref[0:1, :fc1]
    b2 = b_ref[1:2, :fc2]
    b3 = b_ref[2:3, :n_pad]

    # fc1 + ReLU (bf16 MXU inputs, f32 accumulation; no-op cast if x is bf16).
    h1 = jnp.dot(x_ref[...].astype(w1_ref.dtype), w1_ref[...],
                 preferred_element_type=jnp.float32)
    h1 = jnp.maximum(h1 + b1, 0.0)
    # fc2 + ReLU
    h2 = jnp.dot(h1.astype(w2_ref.dtype), w2_ref[...],
                 preferred_element_type=jnp.float32)
    h2 = jnp.maximum(h2 + b2, 0.0)
    # fc3: lane-padded logits; padded lanes are pinned to -1e30 via b3 so the
    # softmax mass stays on the real actions.
    logits = jnp.dot(h2.astype(w3_ref.dtype), w3_ref[...],
                     preferred_element_type=jnp.float32) + b3
    # Numerically stable softmax over the 128-wide (padded) action axis.
    # Exact divide (not pl.reciprocal approx): probs must sum to 1 and feed
    # PPO log-prob ratios downstream.
    m = jnp.max(logits, axis=1, keepdims=True)
    e = jnp.exp(logits - m)
    denom = jnp.sum(e, axis=1, keepdims=True)
    probs_ref[...] = (e / denom).astype(probs_ref.dtype)


@functools.partial(jax.jit, static_argnames=("block_batch",))
def actor_forward_padded(x, w1, w2, w3p, b_rows, *, block_batch=2048):
    """Fused actor forward.  Returns lane-padded probs (batch, n_pad); the
    real actions are columns [:n_actions] — index lazily downstream (or fuse
    the Categorical consumers) instead of materializing a sliced copy."""
    batch, in_dim = x.shape
    fc1 = w1.shape[1]
    fc2 = w2.shape[1]
    n_pad = w3p.shape[1]
    b_width = b_rows.shape[1]

    # Single grid step for batches up to block_batch: this model is only
    # ~0.2 MFLOP/row, so the kernel is launch-/latency-bound and extra grid
    # steps are pure per-step overhead (no forced split for 1-TC v5e/v6e;
    # v7x only benefits from sharding once batches exceed block_batch).
    bm = min(block_batch, _round_up(batch, 8))
    grid = (pl.cdiv(batch, bm),)

    return pl.pallas_call(
        _actor_kernel,
        out_shape=jax.ShapeDtypeStruct((batch, n_pad), jnp.float32),
        grid_spec=pltpu.PrefetchScalarGridSpec(
            num_scalar_prefetch=0,
            grid=grid,
            in_specs=[
                pl.BlockSpec((bm, in_dim), lambda i: (i, 0)),
                pl.BlockSpec((in_dim, fc1), lambda i: (0, 0)),
                pl.BlockSpec((fc1, fc2), lambda i: (0, 0)),
                pl.BlockSpec((fc2, n_pad), lambda i: (0, 0)),
                pl.BlockSpec((3, b_width), lambda i: (0, 0)),
            ],
            out_specs=pl.BlockSpec((bm, n_pad), lambda i: (i, 0)),
        ),
        compiler_params=pltpu.CompilerParams(
            dimension_semantics=("parallel",),
            # ~11 MiB peak at bm=2048; 32 MiB fits scoped/physical VMEM on
            # v5e (128 MiB phys), v6e (128 MiB) and v7x (64 MiB, 32 scoped).
            vmem_limit_bytes=32 * 1024 * 1024,
        ),
    )(x, w1, w2, w3p, b_rows)


def init_params(key, in_dim, fc1_dims, fc2_dims, n_actions):
    """Deterministic init mimicking PyTorch nn.Linear defaults
    (uniform(-1/sqrt(fan_in), 1/sqrt(fan_in))).  Weights as (in, out)."""
    ks = jax.random.split(key, 6)

    def lin(kw, kb, fan_in, fan_out):
        bound = 1.0 / jnp.sqrt(float(fan_in))
        w = jax.random.uniform(kw, (fan_in, fan_out), jnp.float32,
                               -bound, bound)
        b = jax.random.uniform(kb, (1, fan_out), jnp.float32, -bound, bound)
        return w, b

    w1, b1 = lin(ks[0], ks[1], in_dim, fc1_dims)
    w2, b2 = lin(ks[2], ks[3], fc1_dims, fc2_dims)
    w3, b3 = lin(ks[4], ks[5], fc2_dims, n_actions)
    return w1, b1, w2, b2, w3, b3


def pack_params(w1, b1, w2, b2, w3, b3, *, weight_dtype=jnp.bfloat16):
    """One-time packing: lane-pad the action dim to a multiple of 128 (zero
    w3 columns, -1e30 f32 bias lanes), cast weights to bf16, and stack the
    three biases row-wise into a single (3, max_width) f32 buffer."""
    fc1 = w1.shape[1]
    fc2 = w2.shape[1]
    n_actions = w3.shape[1]
    n_pad = max(128, _round_up(n_actions, 128))
    width = max(fc1, fc2, n_pad)

    w3p = jnp.zeros((w3.shape[0], n_pad), jnp.float32)
    w3p = w3p.at[:, :n_actions].set(w3)

    b_rows = jnp.zeros((3, width), jnp.float32)
    b_rows = b_rows.at[0, :fc1].set(b1.reshape(-1).astype(jnp.float32))
    b_rows = b_rows.at[1, :fc2].set(b2.reshape(-1).astype(jnp.float32))
    b3_row = jnp.full((n_pad,), -1e30, jnp.float32)
    b3_row = b3_row.at[:n_actions].set(b3.reshape(-1).astype(jnp.float32))
    b_rows = b_rows.at[2, :n_pad].set(b3_row)  # keep f32 (-1e30 lanes)

    return (w1.astype(weight_dtype), w2.astype(weight_dtype),
            w3p.astype(weight_dtype), b_rows, n_actions)


if __name__ == "__main__":
    # Shapes consistent with the module: input_dims=(32,), n_actions=4,
    # fc1_dims=fc2_dims=256 (module defaults), batch=8 (typical PPO minibatch).
    batch, in_dim, fc1_dims, fc2_dims, n_actions = 8, 32, 256, 256, 4

    key = jax.random.PRNGKey(0)
    k_x, k_p = jax.random.split(key)
    state = jax.random.normal(k_x, (batch, in_dim), jnp.float32)
    w1, b1, w2, b2, w3, b3 = init_params(k_p, in_dim, fc1_dims, fc2_dims,
                                         n_actions)
    w1p, w2p, w3p, b_rows, na = pack_params(w1, b1, w2, b2, w3, b3)

    probs_pad = actor_forward_padded(state, w1p, w2p, w3p, b_rows)
    probs_pad = jax.block_until_ready(probs_pad)
    # Consumers index the real actions lazily; done here only for validation.
    probs = probs_pad[:, :na]

    # Reference in plain JAX with the same bf16-input / f32-accumulate math.
    h1 = jnp.maximum(
        jnp.dot(state.astype(jnp.bfloat16), w1.astype(jnp.bfloat16),
                preferred_element_type=jnp.float32) + b1, 0.0)
    h2 = jnp.maximum(
        jnp.dot(h1.astype(jnp.bfloat16), w2.astype(jnp.bfloat16),
                preferred_element_type=jnp.float32) + b2, 0.0)
    logits = jnp.dot(h2.astype(jnp.bfloat16), w3.astype(jnp.bfloat16),
                     preferred_element_type=jnp.float32) + b3
    ref = jax.nn.softmax(logits, axis=1)

    assert probs.shape == (batch, n_actions)
    assert jnp.allclose(probs, ref, atol=2e-3, rtol=2e-3)
    assert jnp.allclose(jnp.sum(probs, axis=1), 1.0, atol=2e-3)
    # Padded lanes carry zero probability mass.
    assert float(jnp.max(probs_pad[:, n_actions:])) == 0.0

    # TODO(synk): Categorical sampling/log_prob/entropy is a host-side
    # distribution object in PyTorch; the kernel returns its `probs`
    # parameterization (fuse sampling in-kernel if the consumer needs it).
    print("KERNEL_OK")
</pallas_src>

<mosaic_0001>
module attributes {stable_mosaic.version = 11 : i64} {
  func.func @_actor_kernel(%arg0: i32, %arg1: memref<8x32xf32, #tpu.memory_space<vmem>>, %arg2: memref<32x256xbf16, #tpu.memory_space<vmem>>, %arg3: memref<256x256xbf16, #tpu.memory_space<vmem>>, %arg4: memref<256x128xbf16, #tpu.memory_space<vmem>>, %arg5: memref<3x256xf32, #tpu.memory_space<vmem>>, %arg6: memref<8x128xf32, #tpu.memory_space<vmem>>) attributes {dimension_semantics = [#tpu.dimension_semantics<parallel>], iteration_bounds = array<i64: 1>, scalar_prefetch = 0 : i64, scratch_operands = 0 : i64, tpu.core_type = #tpu.core_type<tc>, window_params = [{transform_indices = @transform_0, window_bounds = array<i64: 8, 32>}, {pipeline_mode = #tpu.pipeline_mode<synchronous>, transform_indices = @transform_1, window_bounds = array<i64: 32, 256>}, {pipeline_mode = #tpu.pipeline_mode<synchronous>, transform_indices = @transform_2, window_bounds = array<i64: 256, 256>}, {pipeline_mode = #tpu.pipeline_mode<synchronous>, transform_indices = @transform_3, window_bounds = array<i64: 256, 128>}, {pipeline_mode = #tpu.pipeline_mode<synchronous>, transform_indices = @transform_4, window_bounds = array<i64: 3, 256>}, {transform_indices = @transform_5, window_bounds = array<i64: 8, 128>}]} {
    %c0 = arith.constant 0 : index
    %c0_0 = arith.constant 0 : index
    %0 = vector.load %arg5[%c0, %c0_0] : memref<3x256xf32, #tpu.memory_space<vmem>>, vector<1x256xf32>
    %c1 = arith.constant 1 : index
    %c0_1 = arith.constant 0 : index
    %1 = vector.load %arg5[%c1, %c0_1] : memref<3x256xf32, #tpu.memory_space<vmem>>, vector<1x256xf32>
    %c2 = arith.constant 2 : index
    %c0_2 = arith.constant 0 : index
    %2 = vector.load %arg5[%c2, %c0_2] : memref<3x256xf32, #tpu.memory_space<vmem>>, vector<1x128xf32>
    %c0_3 = arith.constant 0 : index
    %c0_4 = arith.constant 0 : index
    %3 = vector.load %arg1[%c0_3, %c0_4] : memref<8x32xf32, #tpu.memory_space<vmem>>, vector<8x32xf32>
    %4 = arith.truncf %3 : vector<8x32xf32> to vector<8x32xbf16>
    %c0_5 = arith.constant 0 : index
    %c0_6 = arith.constant 0 : index
    %5 = vector.load %arg2[%c0_5, %c0_6] : memref<32x256xbf16, #tpu.memory_space<vmem>>, vector<32x256xbf16>
    %cst = arith.constant dense<0.000000e+00> : vector<8x256xf32>
    %6 = tpu.matmul %4, %5, %cst {dimension_numbers = #tpu.dot_dimension_numbers<[1], [0], [0], [1], [0, 0, 1, 1], [], []>} : vector<8x32xbf16>, vector<32x256xbf16>, vector<8x256xf32> -> vector<8x256xf32>
    %7 = vector.broadcast %0 : vector<1x256xf32> to vector<8x256xf32>
    %8 = arith.addf %6, %7 : vector<8x256xf32>
    %cst_7 = arith.constant 0.000000e+00 : f32
    %9 = vector.broadcast %cst_7 : f32 to vector<8x256xf32>
    %10 = arith.maximumf %8, %9 : vector<8x256xf32>
    %11 = arith.truncf %10 : vector<8x256xf32> to vector<8x256xbf16>
    %c0_8 = arith.constant 0 : index
    %c0_9 = arith.constant 0 : index
    %12 = vector.load %arg3[%c0_8, %c0_9] : memref<256x256xbf16, #tpu.memory_space<vmem>>, vector<256x256xbf16>
    %cst_10 = arith.constant dense<0.000000e+00> : vector<8x256xf32>
    %13 = tpu.matmul %11, %12, %cst_10 {dimension_numbers = #tpu.dot_dimension_numbers<[1], [0], [0], [1], [0, 0, 1, 1], [], []>} : vector<8x256xbf16>, vector<256x256xbf16>, vector<8x256xf32> -> vector<8x256xf32>
    %14 = vector.broadcast %1 : vector<1x256xf32> to vector<8x256xf32>
    %15 = arith.addf %13, %14 : vector<8x256xf32>
    %cst_11 = arith.constant 0.000000e+00 : f32
    %16 = vector.broadcast %cst_11 : f32 to vector<8x256xf32>
    %17 = arith.maximumf %15, %16 : vector<8x256xf32>
    %18 = arith.truncf %17 : vector<8x256xf32> to vector<8x256xbf16>
    %c0_12 = arith.constant 0 : index
    %c0_13 = arith.constant 0 : index
    %19 = vector.load %arg4[%c0_12, %c0_13] : memref<256x128xbf16, #tpu.memory_space<vmem>>, vector<256x128xbf16>
    %cst_14 = arith.constant dense<0.000000e+00> : vector<8x128xf32>
    %20 = tpu.matmul %18, %19, %cst_14 {dimension_numbers = #tpu.dot_dimension_numbers<[1], [0], [0], [1], [0, 0, 1, 1], [], []>} : vector<8x256xbf16>, vector<256x128xbf16>, vector<8x128xf32> -> vector<8x128xf32>
    %21 = vector.broadcast %2 : vector<1x128xf32> to vector<8x128xf32>
    %22 = arith.addf %20, %21 : vector<8x128xf32>
    %cst_15 = arith.constant dense<0xFF800000> : vector<8xf32>
    %23 = vector.multi_reduction <maximumf>, %22, %cst_15 [1] : vector<8x128xf32> to vector<8xf32>
    %24 = vector.shape_cast %23 : vector<8xf32> to vector<8x1xf32>
    %25 = vector.broadcast %24 : vector<8x1xf32> to vector<8x128xf32>
    %26 = arith.subf %22, %25 : vector<8x128xf32>
    %27 = math.exp %26 : vector<8x128xf32>
    %cst_16 = arith.constant dense<0.000000e+00> : vector<8xf32>
    %28 = vector.multi_reduction <add>, %27, %cst_16 [1] : vector<8x128xf32> to vector<8xf32>
    %29 = vector.shape_cast %28 : vector<8xf32> to vector<8x1xf32>
    %30 = vector.broadcast %29 : vector<8x1xf32> to vector<8x128xf32>
    %31 = arith.divf %27, %30 : vector<8x128xf32>
    %c0_17 = arith.constant 0 : index
    %c0_18 = arith.constant 0 : index
    %32 = vector.load %arg6[%c0_17, %c0_18] : memref<8x128xf32, #tpu.memory_space<vmem>>, vector<8x128xf32>
    tpu.vector_store %arg6[%c0_17, %c0_18], %31 {strides = array<i32>} : memref<8x128xf32, #tpu.memory_space<vmem>>, vector<8x128xf32>,
    return
  }
  func.func @transform_0(%arg0: i32) -> (i32, i32) {
    %c0_i32 = arith.constant 0 : i32
    %c0_i32_0 = arith.constant 0 : i32
    return %arg0, %c0_i32 : i32, i32
  }
  func.func @transform_1(%arg0: i32) -> (i32, i32) {
    %c0_i32 = arith.constant 0 : i32
    %c0_i32_0 = arith.constant 0 : i32
    %c0_i32_1 = arith.constant 0 : i32
    return %c0_i32, %c0_i32_0 : i32, i32
  }
  func.func @transform_2(%arg0: i32) -> (i32, i32) {
    %c0_i32 = arith.constant 0 : i32
    %c0_i32_0 = arith.constant 0 : i32
    %c0_i32_1 = arith.constant 0 : i32
    return %c0_i32, %c0_i32_0 : i32, i32
  }
  func.func @transform_3(%arg0: i32) -> (i32, i32) {
    %c0_i32 = arith.constant 0 : i32
    %c0_i32_0 = arith.constant 0 : i32
    %c0_i32_1 = arith.constant 0 : i32
    return %c0_i32, %c0_i32_0 : i32, i32
  }
  func.func @transform_4(%arg0: i32) -> (i32, i32) {
    %c0_i32 = arith.constant 0 : i32
    %c0_i32_0 = arith.constant 0 : i32
    %c0_i32_1 = arith.constant 0 : i32
    return %c0_i32, %c0_i32_0 : i32, i32
  }
  func.func @transform_5(%arg0: i32) -> (i32, i32) {
    %c0_i32 = arith.constant 0 : i32
    %c0_i32_0 = arith.constant 0 : i32
    return %arg0, %c0_i32 : i32, i32
  }
}

</mosaic_0001>

<llo_original>
// kernel: actor_forward_padded.1
$region0: #{actor_forward_padded.1}
  #allocation0 [shape = 'u32[]', space=smem, size = 0x4, offset = 0x4, fixed_abs, tag = 'smem constant byte address 0x4 - core index']
  #allocation1 [shape = 'u32[144,128]{1,0:T(1,128)}', space=vmem, size = 0x12000, scoped, tag = 'internal scratch']
  %s0 = inlined_call_operand.hbm [shape: f32[8,32], index: 0, kind: input, shape index: {}]
  %s1 = inlined_call_operand.hbm [shape: bf16[32,256], index: 1, kind: input, shape index: {}]
  %s2 = inlined_call_operand.hbm [shape: bf16[256,256], index: 2, kind: input, shape index: {}]
  %s3 = inlined_call_operand.hbm [shape: bf16[256,128], index: 3, kind: input, shape index: {}]
  %s4 = inlined_call_operand.hbm [shape: f32[3,256], index: 4, kind: input, shape index: {}]
  %s5 = inlined_call_operand.hbm [shape: f32[8,128], index: 5, kind: output, shape index: {}]
  %s6 = sld [smem:[#allocation0]]
  $region50: #{actor_forward_padded.1} parent=0
    _
  %s8 = ssub.s32 1, %s6
  %s9 = scalar_select 0, %s8, %s6
  $region1: #{actor_forward_padded.1} parent=0
    #allocation2 [shape = 'u8[4096]{0}', space=vmem, size = 0x1000, scoped, tag = 'input window, operand 0, single buffered']
    #allocation3 [shape = 's32[1]{0}', space=sflag, size = 0x4, scoped, tag = 'scoped memory for actor_forward_padded.1']
    #allocation4 [shape = 's32[1]{0}', space=sflag, size = 0x4, scoped, tag = 'scoped memory for actor_forward_padded.1']
    #allocation5 [shape = 'u8[16384]{0}', space=vmem, size = 0x4000, scoped, tag = 'input window, operand 1, single buffered']
    #allocation6 [shape = 's32[1]{0}', space=sflag, size = 0x4, scoped, tag = 'scoped memory for actor_forward_padded.1']
    #allocation7 [shape = 'u8[131072]{0}', space=vmem, size = 0x20000, scoped, tag = 'input window, operand 2, single buffered']
    #allocation8 [shape = 'u8[65536]{0}', space=vmem, size = 0x10000, scoped, tag = 'input window, operand 3, single buffered']
    #allocation9 [shape = 's32[1]{0}', space=sflag, size = 0x4, scoped, tag = 'scoped memory for actor_forward_padded.1']
    #allocation10 [shape = 'u8[4096]{0}', space=vmem, size = 0x1000, scoped, tag = 'input window, operand 4, single buffered']
    #allocation11 [shape = 'u8[4096]{0}', space=vmem, size = 0x1000, scoped, tag = 'output window, operand 0, single buffered']
    %10 = vsyncpa [#allocation3], 0
    %11 = vsyncpa [#allocation6], 0
    %12 = vsyncpa [#allocation9], 0
    %13 = vsyncpa [#allocation4], 0
    // Predicated region
    $region2: #{actor_forward_padded.1} parent=1 // pred_check
      _
    $region3: #{actor_forward_padded.1} parent=1 // pred_check_branch
      %15 = sbr.rel (0) target = $region5
    $region4: #{actor_forward_padded.1} parent=1 // pred_region
      %s17 = ssub.s32 128, 128
      %18 = vsyncadd [#allocation3], %s17
      %s20 = sshll.u32 [#allocation2], 4
      %s21 = int_to_ptr.vmem [resolvable:$true] %s20
      %23 = dma.hbm_to_vmem [thread:$0]  %s0, 128, %s21, [#allocation3]
    $region5: #{actor_forward_padded.1} parent=1 // pred_fallthru
      _
    // Predicated region
    $region6: #{actor_forward_padded.1} parent=1 // pred_check
      _
    $region7: #{actor_forward_padded.1} parent=1 // pred_check_branch
      %25 = sbr.rel (0) target = $region9
    $region8: #{actor_forward_padded.1} parent=1 // pred_region
      %s27 = ssub.s32 512, 512
      %28 = vsyncadd [#allocation6], %s27
      %s29 = sshll.u32 [#allocation5], 4
      %s30 = int_to_ptr.vmem [resolvable:$true] %s29
      %35 = dma.hbm_to_vmem [thread:$0]  %s1, 512, %s30, [#allocation6], 128, 128, 8
    $region9: #{actor_forward_padded.1} parent=1 // pred_fallthru
      _
    // Predicated region
    $region10: #{actor_forward_padded.1} parent=1 // pred_check
      _
    $region11: #{actor_forward_padded.1} parent=1 // pred_check_branch
      %37 = sbr.rel (0) target = $region13
    $region12: #{actor_forward_padded.1} parent=1 // pred_region
      %s39 = ssub.s32 4096, 4096
      %40 = vsyncadd [#allocation6], %s39
      %s41 = sshll.u32 [#allocation7], 4
      %s42 = int_to_ptr.vmem [resolvable:$true] %s41
      %47 = dma.hbm_to_vmem [thread:$0]  %s2, 4096, %s42, [#allocation6], 128, 128, 8
    $region13: #{actor_forward_padded.1} parent=1 // pred_fallthru
      _
    // Predicated region
    $region14: #{actor_forward_padded.1} parent=1 // pred_check
      _
    $region15: #{actor_forward_padded.1} parent=1 // pred_check_branch
      %49 = sbr.rel (0) target = $region17
    $region16: #{actor_forward_padded.1} parent=1 // pred_region
      %s51 = ssub.s32 2048, 2048
      %52 = vsyncadd [#allocation9], %s51
      %s53 = sshll.u32 [#allocation8], 4
      %s54 = int_to_ptr.vmem [resolvable:$true] %s53
      %59 = dma.hbm_to_vmem [thread:$0]  %s3, 2048, %s54, [#allocation9], 64, 64, 4
    $region17: #{actor_forward_padded.1} parent=1 // pred_fallthru
      _
    // Predicated region
    $region18: #{actor_forward_padded.1} parent=1 // pred_check
      _
    $region19: #{actor_forward_padded.1} parent=1 // pred_check_branch
      %61 = sbr.rel (0) target = $region21
    $region20: #{actor_forward_padded.1} parent=1 // pred_region
      %s63 = ssub.s32 128, 128
      %64 = vsyncadd [#allocation9], %s63
      %s66 = sshll.u32 [#allocation10], 4
      %s67 = int_to_ptr.vmem [resolvable:$true] %s66
      %69 = dma.hbm_to_vmem [thread:$0]  %s4, 128, %s67, [#allocation9]
    $region21: #{actor_forward_padded.1} parent=1 // pred_fallthru
      _
    // Predicated region
    $region22: #{actor_forward_padded.1} parent=1 // pred_check
      _
    $region23: #{actor_forward_padded.1} parent=1 // pred_check_branch
      %71 = sbr.rel (0) target = $region25
    $region24: #{actor_forward_padded.1} parent=1 // pred_region
      %72 = dma.done [#allocation3], 128
    $region25: #{actor_forward_padded.1} parent=1 // pred_fallthru
      _
    // Predicated region
    $region26: #{actor_forward_padded.1} parent=1 // pred_check
      _
    $region27: #{actor_forward_padded.1} parent=1 // pred_check_branch
      %74 = sbr.rel (0) target = $region29
    $region28: #{actor_forward_padded.1} parent=1 // pred_region
      %75 = dma.done [#allocation6], 512
    $region29: #{actor_forward_padded.1} parent=1 // pred_fallthru
      _
    // Predicated region
    $region30: #{actor_forward_padded.1} parent=1 // pred_check
      _
    $region31: #{actor_forward_padded.1} parent=1 // pred_check_branch
      %77 = sbr.rel (0) target = $region33
    $region32: #{actor_forward_padded.1} parent=1 // pred_region
      %78 = dma.done [#allocation6], 4096
    $region33: #{actor_forward_padded.1} parent=1 // pred_fallthru
      _
    // Predicated region
    $region34: #{actor_forward_padded.1} parent=1 // pred_check
      _
    $region35: #{actor_forward_padded.1} parent=1 // pred_check_branch
      %80 = sbr.rel (0) target = $region37
    $region36: #{actor_forward_padded.1} parent=1 // pred_region
      %81 = dma.done [#allocation9], 2048
    $region37: #{actor_forward_padded.1} parent=1 // pred_fallthru
      _
    // Predicated region
    $region38: #{actor_forward_padded.1} parent=1 // pred_check
      _
    $region39: #{actor_forward_padded.1} parent=1 // pred_check_branch
      %83 = sbr.rel (0) target = $region41
    $region40: #{actor_forward_padded.1} parent=1 // pred_region
      %84 = dma.done [#allocation9], 128
    $region41: #{actor_forward_padded.1} parent=1 // pred_fallthru
      _
    %v86 = vld [vmem:[#allocation10] ss:$4 sm:$0x3]
    %s87 = scalar_lea.vmem [#allocation10], 1
    %v88 = vld [vmem:[%s87] ss:$4 sm:$0x3]
    %v89 = vld [vmem:[#allocation10 + $0x2] sm:$0x1]
    %v90 = vld [vmem:[#allocation2] sm:$0xff]
    %v91 = vpack.c.bf16 %v90, %v90
    %v92 = vld [vmem:[#allocation5] sm:$0xff]
    %v93 = vld [vmem:[#allocation5 + $0x8] sm:$0xff]
    %v94 = vld [vmem:[#allocation5 + $0x10] sm:$0xff]
    %v95 = vld [vmem:[#allocation5 + $0x18] sm:$0xff]
    %v97 = vlaneseq
    %v98 = vshrl.u32 %v97, 7
    %v99 = vsub.s32 0, %v98
    %v100 = vrot.slane %v86, %v99
    %v101 = vlaneseq
    %v102 = vshrl.u32 %v101, 7
    %v103 = vsub.s32 1, %v102
    %v104 = vrot.slane %v86, %v103
    %v111 = vunpack.c.l.b16 %v92
    %v112 = vunpack.c.h.b16 %v92
    %v113 = vunpack.c.l.b16 %v93
    %v114 = vunpack.c.h.b16 %v93
    %v115 = vunpack.c.l.b16 %v94
    %v116 = vunpack.c.h.b16 %v94
    %v117 = vunpack.c.l.b16 %v95
    %v118 = vunpack.c.h.b16 %v95
    %v119 = vpack.c.b16 %v113, %v111
    %v120 = vpack.c.b16 %v114, %v112
    %v121 = vpack.c.b16 %v117, %v115
    %v122 = vpack.c.b16 %v118, %v116
    %vm127 = vcmask 261120
    %v129 = vsel %vm127, %v91, 0
    %131 = vmatprep.subr.bf16.mxu0 0
    %132 = vmatpush1.bf16.msra.mxu0 0
    %133 = vmatprep.subr.bf16.mxu0 0
    %134 = vmatpush1.bf16.msra.mxu0 0
    %135 = vmatprep.subr.bf16.mxu0 0
    %136 = vmatpush1.bf16.msra.mxu0 0
    %137 = vmatprep.subr.bf16.mxu0 0
    %138 = vmatpush1.bf16.msra.mxu0 0
    %139 = vmatprep.subr.bf16.mxu0 0
    %140 = vmatpush1.bf16.msra.mxu0 0
    %141 = vmatprep.subr.bf16.mxu0 0
    %142 = vmatpush1.bf16.msra.mxu0 0
    %143 = vmatprep.subr.bf16.mxu0 %v122
    %144 = vmatpush1.bf16.msra.mxu0 %v121
    %145 = vmatprep.subr.bf16.mxu0 %v120
    %146 = vmatpush1.bf16.msra.mxu0 %v119
    %147 = vmatprep.subr.bf16.mxu0 0
    %148 = vmatpush2.bf16.msra.mxu0 0
    %149 = vmatprep.subr.bf16.mxu0 0
    %150 = vmatpush2.bf16.msra.mxu0 0
    %151 = vmatprep.subr.bf16.mxu0 0
    %152 = vmatpush2.bf16.msra.mxu0 0
    %153 = vmatprep.subr.bf16.mxu0 0
    %154 = vmatpush2.bf16.msra.mxu0 0
    %155 = vmatprep.subr.bf16.mxu0 0
    %156 = vmatpush2.bf16.msra.mxu0 0
    %157 = vmatprep.subr.bf16.mxu0 0
    %158 = vmatpush2.bf16.msra.mxu0 0
    %159 = vmatprep.subr.bf16.mxu0 0
    %160 = vmatpush2.bf16.msra.mxu0 0
    %161 = vmatprep.subr.bf16.mxu0 0
    %162 = vmatpush2.bf16.msra.mxu0 0
    %163 = vmatprep.mubr.bf16.mxu0 0
    %164 = vmatmul.mubr.bf16.gmra.mxu0 %v129
    %v165 = vpop.f32.mrf.mxu0
    %v166 = vadd.f32 %v100, %v165
    %v167 = vpop.f32.mrf.mxu0
    %v168 = vadd.f32 %v104, %v167
    %v169 = vpop.f32.mrf.mxu0
    %v170 = vpop.f32.mrf.mxu0
    %171 = vdwg.mxu0
    %v172 = vmax.f32 %v166, 0.0
    %v173 = vmax.f32 %v168, 0.0
    %v174 = vpack.c.bf16 %v172, %v172
    %v175 = vpack.c.bf16 %v173, %v173
    %v176 = vld [vmem:[#allocation7] sm:$0xff]
    %v177 = vld [vmem:[#allocation7 + $0x8] sm:$0xff]
    %v178 = vld [vmem:[#allocation7 + $0x10] sm:$0xff]
    %v179 = vld [vmem:[#allocation7 + $0x18] sm:$0xff]
    %v180 = vld [vmem:[#allocation7 + $0x20] sm:$0xff]
    %v181 = vld [vmem:[#allocation7 + $0x28] sm:$0xff]
    %v182 = vld [vmem:[#allocation7 + $0x30] sm:$0xff]
    %v183 = vld [vmem:[#allocation7 + $0x38] sm:$0xff]
    %v184 = vld [vmem:[#allocation7 + $0x40] sm:$0xff]
    %v185 = vld [vmem:[#allocation7 + $0x48] sm:$0xff]
    %v186 = vld [vmem:[#allocation7 + $0x50] sm:$0xff]
    %v187 = vld [vmem:[#allocation7 + $0x58] sm:$0xff]
    %v188 = vld [vmem:[#allocation7 + $0x60] sm:$0xff]
    %v189 = vld [vmem:[#allocation7 + $0x68] sm:$0xff]
    %v190 = vld [vmem:[#allocation7 + $0x70] sm:$0xff]
    %v191 = vld [vmem:[#allocation7 + $0x78] sm:$0xff]
    %v192 = vld [vmem:[#allocation7 + $0x80] sm:$0xff]
    %v193 = vld [vmem:[#allocation7 + $0x88] sm:$0xff]
    %v194 = vld [vmem:[#allocation7 + $0x90] sm:$0xff]
    %v195 = vld [vmem:[#allocation7 + $0x98] sm:$0xff]
    %v196 = vld [vmem:[#allocation7 + $0xa0] sm:$0xff]
    %v197 = vld [vmem:[#allocation7 + $0xa8] sm:$0xff]
    %v198 = vld [vmem:[#allocation7 + $0xb0] sm:$0xff]
    %v199 = vld [vmem:[#allocation7 + $0xb8] sm:$0xff]
    %v200 = vld [vmem:[#allocation7 + $0xc0] sm:$0xff]
    %v201 = vld [vmem:[#allocation7 + $0xc8] sm:$0xff]
    %v202 = vld [vmem:[#allocation7 + $0xd0] sm:$0xff]
    %v203 = vld [vmem:[#allocation7 + $0xd8] sm:$0xff]
    %v204 = vld [vmem:[#allocation7 + $0xe0] sm:$0xff]
    %v205 = vld [vmem:[#allocation7 + $0xe8] sm:$0xff]
    %v206 = vld [vmem:[#allocation7 + $0xf0] sm:$0xff]
    %v207 = vld [vmem:[#allocation7 + $0xf8] sm:$0xff]
    %v209 = vlaneseq
    %v210 = vshrl.u32 %v209, 7
    %v211 = vsub.s32 0, %v210
    %v212 = vrot.slane %v88, %v211
    %v213 = vlaneseq
    %v214 = vshrl.u32 %v213, 7
    %v215 = vsub.s32 1, %v214
    %v216 = vrot.slane %v88, %v215
    %v251 = vunpack.c.l.b16 %v176
    %v252 = vunpack.c.h.b16 %v176
    %v253 = vunpack.c.l.b16 %v177
    %v254 = vunpack.c.h.b16 %v177
    %v255 = vunpack.c.l.b16 %v178
    %v256 = vunpack.c.h.b16 %v178
    %v257 = vunpack.c.l.b16 %v179
    %v258 = vunpack.c.h.b16 %v179
    %v259 = vunpack.c.l.b16 %v180
    %v260 = vunpack.c.h.b16 %v180
    %v261 = vunpack.c.l.b16 %v181
    %v262 = vunpack.c.h.b16 %v181
    %v263 = vunpack.c.l.b16 %v182
    %v264 = vunpack.c.h.b16 %v182
    %v265 = vunpack.c.l.b16 %v183
    %v266 = vunpack.c.h.b16 %v183
    %v267 = vunpack.c.l.b16 %v184
    %v268 = vunpack.c.h.b16 %v184
    %v269 = vunpack.c.l.b16 %v185
    %v270 = vunpack.c.h.b16 %v185
    %v271 = vunpack.c.l.b16 %v186
    %v272 = vunpack.c.h.b16 %v186
    %v273 = vunpack.c.l.b16 %v187
    %v274 = vunpack.c.h.b16 %v187
    %v275 = vunpack.c.l.b16 %v188
    %v276 = vunpack.c.h.b16 %v188
    %v277 = vunpack.c.l.b16 %v189
    %v278 = vunpack.c.h.b16 %v189
    %v279 = vunpack.c.l.b16 %v190
    %v280 = vunpack.c.h.b16 %v190
    %v281 = vunpack.c.l.b16 %v191
    %v282 = vunpack.c.h.b16 %v191
    %v283 = vunpack.c.l.b16 %v192
    %v284 = vunpack.c.h.b16 %v192
    %v285 = vunpack.c.l.b16 %v193
    %v286 = vunpack.c.h.b16 %v193
    %v287 = vunpack.c.l.b16 %v194
    %v288 = vunpack.c.h.b16 %v194
    %v289 = vunpack.c.l.b16 %v195
    %v290 = vunpack.c.h.b16 %v195
    %v291 = vunpack.c.l.b16 %v196
    %v292 = vunpack.c.h.b16 %v196
    %v293 = vunpack.c.l.b16 %v197
    %v294 = vunpack.c.h.b16 %v197
    %v295 = vunpack.c.l.b16 %v198
    %v296 = vunpack.c.h.b16 %v198
    %v297 = vunpack.c.l.b16 %v199
    %v298 = vunpack.c.h.b16 %v199
    %v299 = vunpack.c.l.b16 %v200
    %v300 = vunpack.c.h.b16 %v200
    %v301 = vunpack.c.l.b16 %v201
    %v302 = vunpack.c.h.b16 %v201
    %v303 = vunpack.c.l.b16 %v202
    %v304 = vunpack.c.h.b16 %v202
    %v305 = vunpack.c.l.b16 %v203
    %v306 = vunpack.c.h.b16 %v203
    %v307 = vunpack.c.l.b16 %v204
    %v308 = vunpack.c.h.b16 %v204
    %v309 = vunpack.c.l.b16 %v205
    %v310 = vunpack.c.h.b16 %v205
    %v311 = vunpack.c.l.b16 %v206
    %v312 = vunpack.c.h.b16 %v206
    %v313 = vunpack.c.l.b16 %v207
    %v314 = vunpack.c.h.b16 %v207
    %v315 = vpack.c.b16 %v253, %v251
    %v316 = vpack.c.b16 %v254, %v252
    %v317 = vpack.c.b16 %v257, %v255
    %v318 = vpack.c.b16 %v258, %v256
    %v319 = vpack.c.b16 %v261, %v259
    %v320 = vpack.c.b16 %v262, %v260
    %v321 = vpack.c.b16 %v265, %v263
    %v322 = vpack.c.b16 %v266, %v264
    %v323 = vpack.c.b16 %v269, %v267
    %v324 = vpack.c.b16 %v270, %v268
    %v325 = vpack.c.b16 %v273, %v271
    %v326 = vpack.c.b16 %v274, %v272
    %v327 = vpack.c.b16 %v277, %v275
    %v328 = vpack.c.b16 %v278, %v276
    %v329 = vpack.c.b16 %v281, %v279
    %v330 = vpack.c.b16 %v282, %v280
    %v331 = vpack.c.b16 %v285, %v283
    %v332 = vpack.c.b16 %v286, %v284
    %v333 = vpack.c.b16 %v289, %v287
    %v334 = vpack.c.b16 %v290, %v288
    %v335 = vpack.c.b16 %v293, %v291
    %v336 = vpack.c.b16 %v294, %v292
    %v337 = vpack.c.b16 %v297, %v295
    %v338 = vpack.c.b16 %v298, %v296
    %v339 = vpack.c.b16 %v301, %v299
    %v340 = vpack.c.b16 %v302, %v300
    %v341 = vpack.c.b16 %v305, %v303
    %v342 = vpack.c.b16 %v306, %v304
    %v343 = vpack.c.b16 %v309, %v307
    %v344 = vpack.c.b16 %v310, %v308
    %v345 = vpack.c.b16 %v313, %v311
    %v346 = vpack.c.b16 %v314, %v312
    %379 = vmatprep.subr.bf16.mxu0 %v330
    %380 = vmatpush1.bf16.msra.mxu0 %v329
    %381 = vmatprep.subr.bf16.mxu0 %v328
    %382 = vmatpush1.bf16.msra.mxu0 %v327
    %383 = vmatprep.subr.bf16.mxu0 %v326
    %384 = vmatpush1.bf16.msra.mxu0 %v325
    %385 = vmatprep.subr.bf16.mxu0 %v324
    %386 = vmatpush1.bf16.msra.mxu0 %v323
    %387 = vmatprep.subr.bf16.mxu0 %v322
    %388 = vmatpush1.bf16.msra.mxu0 %v321
    %389 = vmatprep.subr.bf16.mxu0 %v320
    %390 = vmatpush1.bf16.msra.mxu0 %v319
    %391 = vmatprep.subr.bf16.mxu0 %v318
    %392 = vmatpush1.bf16.msra.mxu0 %v317
    %393 = vmatprep.subr.bf16.mxu0 %v316
    %394 = vmatpush1.bf16.msra.mxu0 %v315
    %395 = vmatprep.subr.bf16.mxu0 %v346
    %396 = vmatpush2.bf16.msra.mxu0 %v345
    %397 = vmatprep.subr.bf16.mxu0 %v344
    %398 = vmatpush2.bf16.msra.mxu0 %v343
    %399 = vmatprep.subr.bf16.mxu0 %v342
    %400 = vmatpush2.bf16.msra.mxu0 %v341
    %401 = vmatprep.subr.bf16.mxu0 %v340
    %402 = vmatpush2.bf16.msra.mxu0 %v339
    %403 = vmatprep.subr.bf16.mxu0 %v338
    %404 = vmatpush2.bf16.msra.mxu0 %v337
    %405 = vmatprep.subr.bf16.mxu0 %v336
    %406 = vmatpush2.bf16.msra.mxu0 %v335
    %407 = vmatprep.subr.bf16.mxu0 %v334
    %408 = vmatpush2.bf16.msra.mxu0 %v333
    %409 = vmatprep.subr.bf16.mxu0 %v332
    %410 = vmatpush2.bf16.msra.mxu0 %v331
    %411 = vmatprep.mubr.bf16.mxu0 %v175
    %412 = vmatmul.mubr.bf16.gmra.mxu0 %v174
    %v413 = vpop.f32.mrf.mxu0
    %v414 = vadd.f32 %v212, %v413
    %v415 = vpop.f32.mrf.mxu0
    %v416 = vadd.f32 %v216, %v415
    %v417 = vpop.f32.mrf.mxu0
    %v418 = vpop.f32.mrf.mxu0
    %419 = vdwg.mxu0
    %v420 = vmax.f32 %v414, 0.0
    %v421 = vmax.f32 %v416, 0.0
    %v422 = vpack.c.bf16 %v420, %v420
    %v423 = vpack.c.bf16 %v421, %v421
    %v424 = vld [vmem:[#allocation8] sm:$0xf]
    %v425 = vld [vmem:[#allocation8 + $0x4] sm:$0xf]
    %v426 = vld [vmem:[#allocation8 + $0x8] sm:$0xf]
    %v427 = vld [vmem:[#allocation8 + $0xc] sm:$0xf]
    %v428 = vld [vmem:[#allocation8 + $0x10] sm:$0xf]
    %v429 = vld [vmem:[#allocation8 + $0x14] sm:$0xf]
    %v430 = vld [vmem:[#allocation8 + $0x18] sm:$0xf]
    %v431 = vld [vmem:[#allocation8 + $0x1c] sm:$0xf]
    %v432 = vld [vmem:[#allocation8 + $0x20] sm:$0xf]
    %v433 = vld [vmem:[#allocation8 + $0x24] sm:$0xf]
    %v434 = vld [vmem:[#allocation8 + $0x28] sm:$0xf]
    %v435 = vld [vmem:[#allocation8 + $0x2c] sm:$0xf]
    %v436 = vld [vmem:[#allocation8 + $0x30] sm:$0xf]
    %v437 = vld [vmem:[#allocation8 + $0x34] sm:$0xf]
    %v438 = vld [vmem:[#allocation8 + $0x38] sm:$0xf]
    %v439 = vld [vmem:[#allocation8 + $0x3c] sm:$0xf]
    %v440 = vld [vmem:[#allocation8 + $0x40] sm:$0xf]
    %v441 = vld [vmem:[#allocation8 + $0x44] sm:$0xf]
    %v442 = vld [vmem:[#allocation8 + $0x48] sm:$0xf]
    %v443 = vld [vmem:[#allocation8 + $0x4c] sm:$0xf]
    %v444 = vld [vmem:[#allocation8 + $0x50] sm:$0xf]
    %v445 = vld [vmem:[#allocation8 + $0x54] sm:$0xf]
    %v446 = vld [vmem:[#allocation8 + $0x58] sm:$0xf]
    %v447 = vld [vmem:[#allocation8 + $0x5c] sm:$0xf]
    %v448 = vld [vmem:[#allocation8 + $0x60] sm:$0xf]
    %v449 = vld [vmem:[#allocation8 + $0x64] sm:$0xf]
    %v450 = vld [vmem:[#allocation8 + $0x68] sm:$0xf]
    %v451 = vld [vmem:[#allocation8 + $0x6c] sm:$0xf]
    %v452 = vld [vmem:[#allocation8 + $0x70] sm:$0xf]
    %v453 = vld [vmem:[#allocation8 + $0x74] sm:$0xf]
    %v454 = vld [vmem:[#allocation8 + $0x78] sm:$0xf]
    %v455 = vld [vmem:[#allocation8 + $0x7c] sm:$0xf]
    %v456 = vlaneseq
    %v457 = vshrl.u32 %v456, 7
    %v458 = vsub.s32 0, %v457
    %v459 = vrot.slane %v89, %v458
    %v492 = vunpack.c.l.b16 %v424
    %v493 = vunpack.c.l.b16 %v425
    %v494 = vunpack.c.l.b16 %v426
    %v495 = vunpack.c.l.b16 %v427
    %v496 = vunpack.c.l.b16 %v428
    %v497 = vunpack.c.l.b16 %v429
    %v498 = vunpack.c.l.b16 %v430
    %v499 = vunpack.c.l.b16 %v431
    %v500 = vunpack.c.l.b16 %v432
    %v501 = vunpack.c.l.b16 %v433
    %v502 = vunpack.c.l.b16 %v434
    %v503 = vunpack.c.l.b16 %v435
    %v504 = vunpack.c.l.b16 %v436
    %v505 = vunpack.c.l.b16 %v437
    %v506 = vunpack.c.l.b16 %v438
    %v507 = vunpack.c.l.b16 %v439
    %v508 = vunpack.c.l.b16 %v440
    %v509 = vunpack.c.l.b16 %v441
    %v510 = vunpack.c.l.b16 %v442
    %v511 = vunpack.c.l.b16 %v443
    %v512 = vunpack.c.l.b16 %v444
    %v513 = vunpack.c.l.b16 %v445
    %v514 = vunpack.c.l.b16 %v446
    %v515 = vunpack.c.l.b16 %v447
    %v516 = vunpack.c.l.b16 %v448
    %v517 = vunpack.c.l.b16 %v449
    %v518 = vunpack.c.l.b16 %v450
    %v519 = vunpack.c.l.b16 %v451
    %v520 = vunpack.c.l.b16 %v452
    %v521 = vunpack.c.l.b16 %v453
    %v522 = vunpack.c.l.b16 %v454
    %v523 = vunpack.c.l.b16 %v455
    %v524 = vpack.c.b16 %v493, %v492
    %v525 = vpack.c.b16 %v495, %v494
    %v526 = vpack.c.b16 %v497, %v496
    %v527 = vpack.c.b16 %v499, %v498
    %v528 = vpack.c.b16 %v501, %v500
    %v529 = vpack.c.b16 %v503, %v502
    %v530 = vpack.c.b16 %v505, %v504
    %v531 = vpack.c.b16 %v507, %v506
    %v532 = vpack.c.b16 %v509, %v508
    %v533 = vpack.c.b16 %v511, %v510
    %v534 = vpack.c.b16 %v513, %v512
    %v535 = vpack.c.b16 %v515, %v514
    %v536 = vpack.c.b16 %v517, %v516
    %v537 = vpack.c.b16 %v519, %v518
    %v538 = vpack.c.b16 %v521, %v520
    %v539 = vpack.c.b16 %v523, %v522
    %556 = vmatprep.subr.bf16.mxu0 0
    %557 = vmatpush1.bf16.msra.mxu0 %v531
    %558 = vmatprep.subr.bf16.mxu0 0
    %559 = vmatpush1.bf16.msra.mxu0 %v530
    %560 = vmatprep.subr.bf16.mxu0 0
    %561 = vmatpush1.bf16.msra.mxu0 %v529
    %562 = vmatprep.subr.bf16.mxu0 0
    %563 = vmatpush1.bf16.msra.mxu0 %v528
    %564 = vmatprep.subr.bf16.mxu0 0
    %565 = vmatpush1.bf16.msra.mxu0 %v527
    %566 = vmatprep.subr.bf16.mxu0 0
    %567 = vmatpush1.bf16.msra.mxu0 %v526
    %568 = vmatprep.subr.bf16.mxu0 0
    %569 = vmatpush1.bf16.msra.mxu0 %v525
    %570 = vmatprep.subr.bf16.mxu0 0
    %571 = vmatpush1.bf16.msra.mxu0 %v524
    %572 = vmatprep.subr.bf16.mxu0 0
    %573 = vmatpush2.bf16.msra.mxu0 %v539
    %574 = vmatprep.subr.bf16.mxu0 0
    %575 = vmatpush2.bf16.msra.mxu0 %v538
    %576 = vmatprep.subr.bf16.mxu0 0
    %577 = vmatpush2.bf16.msra.mxu0 %v537
    %578 = vmatprep.subr.bf16.mxu0 0
    %579 = vmatpush2.bf16.msra.mxu0 %v536
    %580 = vmatprep.subr.bf16.mxu0 0
    %581 = vmatpush2.bf16.msra.mxu0 %v535
    %582 = vmatprep.subr.bf16.mxu0 0
    %583 = vmatpush2.bf16.msra.mxu0 %v534
    %584 = vmatprep.subr.bf16.mxu0 0
    %585 = vmatpush2.bf16.msra.mxu0 %v533
    %586 = vmatprep.subr.bf16.mxu0 0
    %587 = vmatpush2.bf16.msra.mxu0 %v532
    %588 = vmatprep.mubr.bf16.mxu0 %v423
    %589 = vmatmul.mubr.bf16.gmra.mxu0 %v422
    %v590 = vpop.f32.mrf.mxu0
    %v591 = vadd.f32 %v459, %v590
    %v592 = vpop.f32.mrf.mxu0
    %v593 = vpop.f32.mrf.mxu0
    %v594 = vpop.f32.mrf.mxu0
    %595 = vdwg.mxu0
    %596 = vmax.xlane.f32.xlu0 %v591
    %v597 = vpop.xlane.xlu0 %596
    %v598 = vsub.f32 %v591, %v597
    %v599 = vmul.f32 %v598, 1.442695
    %v600 = vpow.pop %v599
    %601 = vadd.xlane.f32.xlu0 %v600
    %v602 = vpop.xlane.xlu0 %601
    %v603 = vrcp.pop %v602
    %v604 = vmul.f32 %v600, %v603
    %605 = vst [vmem:[#allocation11] sm:$0xff] %v604
    // Predicated region
    $region42: #{actor_forward_padded.1} parent=1 // pred_check
      _
    $region43: #{actor_forward_padded.1} parent=1 // pred_check_branch
      %607 = sbr.rel (0) target = $region45
    $region44: #{actor_forward_padded.1} parent=1 // pred_region
      %s609 = ssub.s32 128, 128
      %610 = vsyncadd [#allocation4], %s609
      %s612 = sshll.u32 [#allocation11], 4
      %s613 = int_to_ptr.vmem [resolvable:$true] %s612
      %615 = dma.vmem_to_hbm [thread:$0]  %s613, 128, %s5, [#allocation4]
    $region45: #{actor_forward_padded.1} parent=1 // pred_fallthru
      _
    // Predicated region
    $region46: #{actor_forward_padded.1} parent=1 // pred_check
      _
    $region47: #{actor_forward_padded.1} parent=1 // pred_check_branch
      %617 = sbr.rel (0) target = $region49
    $region48: #{actor_forward_padded.1} parent=1 // pred_region
      %618 = dma.done [#allocation4], 128
    $region49: #{actor_forward_padded.1} parent=1 // pred_fallthru
      _
    %619 = vsyncpa [#allocation3], 1
    %620 = vsyncpa [#allocation6], 1
    %621 = vsyncpa [#allocation9], 1
    %622 = vsyncpa [#allocation4], 1

</llo_original>
